<compile_context>
chip_gen: v6e
topology: v6e:2x2x1
jax: 0.10.0
libtpu: 0.0.40
codegen_flags: <defaults>
</compile_context>

<pallas_src>
import functools
import math

import jax
import jax.numpy as jnp
import numpy as np
from jax import lax
from jax.experimental import pallas as pl
from jax.experimental.pallas import tpu as pltpu


def _vmem_capacity_bytes():
    """Physical VMEM per core; conservative fallback if the query fails."""
    try:
        info = pltpu.get_tpu_info()
        cap = getattr(info, "vmem_capacity_bytes", None)
        if cap:
            return int(cap)
    except Exception:
        pass
    return 64 * 1024 * 1024  # v7x physical VMEM (most restrictive generation)


# ----------------------------------------------------------------------------
# In-kernel helpers (traced inside the kernels).
# ----------------------------------------------------------------------------
def _masked_minmax(x, t, tile_rows, lane_width, n_valid, need_mask):
    """Replace padded / OOB elements with +/-inf so they never win min/max."""
    if not need_mask:
        return x, x
    base = t * (tile_rows * lane_width)
    ridx = lax.broadcasted_iota(jnp.int32, x.shape, 0)
    lidx = lax.broadcasted_iota(jnp.int32, x.shape, 1)
    valid = (base + ridx * lane_width + lidx) < n_valid
    return jnp.where(valid, x, jnp.inf), jnp.where(valid, x, -jnp.inf)


def _tile_reduce(x_min, x_max, tile_rows, acc_rows, lane_width):
    """Reduce an (R, L) tile to (acc_rows, L) in-register (pure VALU)."""
    if tile_rows > acc_rows:
        x_min = jnp.min(
            x_min.reshape(tile_rows // acc_rows, acc_rows, lane_width), axis=0)
        x_max = jnp.max(
            x_max.reshape(tile_rows // acc_rows, acc_rows, lane_width), axis=0)
    return x_min, x_max


def _channel_fold(mn, mx, n_channels, lane_width):
    """Fold lanes of the same channel (lane % C) via doubling rolls (XLU).

    L = lcm(C, 128), so L / C is a power of two and a doubling roll-fold
    covers every same-channel lane, leaving per-channel min/max broadcast to
    all of that channel's lanes.
    """
    shift = n_channels
    while shift < lane_width:
        mn = jnp.minimum(mn, pltpu.roll(mn, shift=shift, axis=1))
        mx = jnp.maximum(mx, pltpu.roll(mx, shift=shift, axis=1))
        shift *= 2
    return mn, mx


# ----------------------------------------------------------------------------
# Fused single-pass kernel: grid (B, 2, grid_t); phase 0 = stats + stash,
# phase 1 = normalize out of the VMEM-resident slab.
# ----------------------------------------------------------------------------
def _fused_kernel(x_ref, o_ref, slab, mn_acc, mx_acc, mn_b, inv_b, *,
                  n_valid, lane_width, n_channels, tile_rows, acc_rows,
                  need_mask):
    p = pl.program_id(1)   # phase: 0 = stats/stash, 1 = normalize
    t = pl.program_id(2)   # row tile within the batch
    R, L = tile_rows, lane_width

    row0 = t * R
    if R % 8 == 0:
        row0 = pl.multiple_of(row0, 8)

    @pl.when(jnp.logical_and(p == 0, t == 0))
    def _init():
        mn_acc[...] = jnp.full(mn_acc.shape, jnp.inf, dtype=jnp.float32)
        mx_acc[...] = jnp.full(mx_acc.shape, -jnp.inf, dtype=jnp.float32)

    @pl.when(p == 0)
    def _stats_phase():
        x_raw = x_ref[0]                          # (R, L), input dtype
        slab[pl.ds(row0, R), :] = x_raw           # stash for phase 1
        x = x_raw.astype(jnp.float32)
        x_min, x_max = _masked_minmax(x, t, R, L, n_valid, need_mask)
        x_min, x_max = _tile_reduce(x_min, x_max, R, acc_rows, L)
        mn_acc[...] = jnp.minimum(mn_acc[...], x_min)
        mx_acc[...] = jnp.maximum(mx_acc[...], x_max)

    @pl.when(jnp.logical_and(p == 1, t == 0))
    def _fold():
        mn = jnp.min(mn_acc[...], axis=0, keepdims=True)   # (1, L)
        mx = jnp.max(mx_acc[...], axis=0, keepdims=True)
        mn, mx = _channel_fold(mn, mx, n_channels, L)
        mn_b[...] = mn
        inv_b[...] = pl.reciprocal(mx - mn, approx=False)   # exact 1/(max-min)

    @pl.when(p == 1)
    def _norm_phase():
        xs = slab[pl.ds(row0, R), :].astype(jnp.float32)
        o_ref[0] = ((xs - mn_b[...]) * inv_b[...]).astype(o_ref.dtype)


# ----------------------------------------------------------------------------
# Two-pass fallback kernels (slab too large for VMEM).
# ----------------------------------------------------------------------------
def _stats_kernel(x_ref, mn_ref, inv_ref, mn_acc, mx_acc, *,
                  n_valid, lane_width, n_channels, tile_rows, acc_rows,
                  need_mask):
    t = pl.program_id(1)
    R, L = tile_rows, lane_width

    @pl.when(t == 0)
    def _init():
        mn_acc[...] = jnp.full(mn_acc.shape, jnp.inf, dtype=jnp.float32)
        mx_acc[...] = jnp.full(mx_acc.shape, -jnp.inf, dtype=jnp.float32)

    x = x_ref[0].astype(jnp.float32)
    x_min, x_max = _masked_minmax(x, t, R, L, n_valid, need_mask)
    x_min, x_max = _tile_reduce(x_min, x_max, R, acc_rows, L)
    mn_acc[...] = jnp.minimum(mn_acc[...], x_min)
    mx_acc[...] = jnp.maximum(mx_acc[...], x_max)

    @pl.when(t == pl.num_programs(1) - 1)
    def _finalize():
        mn = jnp.min(mn_acc[...], axis=0, keepdims=True)
        mx = jnp.max(mx_acc[...], axis=0, keepdims=True)
        mn, mx = _channel_fold(mn, mx, n_channels, L)
        mn_ref[...] = mn
        inv_ref[...] = pl.reciprocal(mx - mn, approx=False)


def _norm_kernel(x_ref, mn_ref, inv_ref, o_ref):
    x = x_ref[0].astype(jnp.float32)
    o_ref[0] = ((x - mn_ref[...]) * inv_ref[...]).astype(o_ref.dtype)


# ----------------------------------------------------------------------------
# Wrapper.
# ----------------------------------------------------------------------------
@functools.partial(jax.jit, static_argnames=("tile_rows", "force_two_pass"))
def intensity_normalisation(x, *, tile_rows=None, force_two_pass=False):
    """Per-batch, per-channel (x - min) / (max - min) for channels-last x."""
    orig_shape = x.shape
    B = x.shape[0]
    C = int(x.shape[-1])
    N = int(np.prod(x.shape[1:]))                 # flat length per batch = S*C
    itemsize = jnp.dtype(x.dtype).itemsize

    # Lane width: smallest multiple of 128 divisible by C.
    L = (C * 128) // math.gcd(C, 128)
    n_rows = -(-N // L)
    padded = n_rows * L

    x_flat = x.reshape(B, N)                      # free (contiguous view)
    if padded != N:
        # TODO(synk): the pad (and the final slice) costs an extra HBM pass of
        # the volume when S*C is not a multiple of lcm(C, 128); a manual-DMA /
        # pl.BoundedSlice ragged-tail path would remove it.  Padded elements
        # are masked out of the stats in-kernel, so correctness is unaffected.
        x_flat = jnp.pad(x_flat, ((0, 0), (0, padded - N)))
    x3 = x_flat.reshape(B, n_rows, L)             # free when no pad

    # Row tile: ~2 MiB of input per tile (multiple of 8 rows). With (8, L)
    # accumulators the tile size is set by the true input itemsize.
    if tile_rows is None:
        r = (2 << 20) // (L * itemsize)
        r -= r % 8
        tile_rows = max(8, r)
    R = min(int(tile_rows), n_rows)
    if R < n_rows:
        R = max(8, R - (R % 8))
    grid_t = -(-n_rows // R)
    need_mask = (grid_t * R * L) != N             # pad tail and/or partial tile
    acc_rows = 8 if (R >= 8 and R % 8 == 0) else R

    fp32 = jnp.float32
    vmem_cap = _vmem_capacity_bytes()

    tile_in_bytes = R * L * itemsize
    tile_f32_bytes = R * L * 4
    slab_rows = grid_t * R                        # slab padded to whole tiles
    slab_bytes = slab_rows * L * itemsize
    # slab + in/out double buffers + accumulators + compiler temporaries.
    fused_bytes = (slab_bytes + 4 * tile_in_bytes + 4 * tile_f32_bytes
                   + 2 * acc_rows * L * 4 + 2 * L * 4 + (1 << 20))
    use_fused = (not force_two_pass) and fused_bytes <= int(0.75 * vmem_cap)

    common = dict(n_valid=N, lane_width=L, n_channels=C,
                  tile_rows=R, acc_rows=acc_rows, need_mask=need_mask)

    if use_fused:
        # Single pass over HBM (~2N traffic).  Input index map pins phase 1 to
        # the last-fetched tile (no re-fetch); output index map pins phase 0 to
        # block 0, which phase 1 overwrites before any writeback can occur.
        gt = grid_t
        vmem_limit = min(vmem_cap, max(32 << 20, fused_bytes + (2 << 20)))
        out3 = pl.pallas_call(
            functools.partial(_fused_kernel, **common),
            out_shape=jax.ShapeDtypeStruct((B, n_rows, L), x.dtype),
            grid_spec=pltpu.PrefetchScalarGridSpec(
                num_scalar_prefetch=0,
                grid=(B, 2, grid_t),
                in_specs=[pl.BlockSpec(
                    (1, R, L),
                    lambda b, p, t: (b, (1 - p) * t + p * (gt - 1), 0))],
                out_specs=pl.BlockSpec((1, R, L),
                                       lambda b, p, t: (b, p * t, 0)),
                scratch_shapes=[
                    pltpu.VMEM((slab_rows, L), x.dtype),   # resident slab
                    pltpu.VMEM((acc_rows, L), fp32),       # running min
                    pltpu.VMEM((acc_rows, L), fp32),       # running max
                    pltpu.VMEM((1, L), fp32),              # broadcast min
                    pltpu.VMEM((1, L), fp32),              # broadcast inv
                ]),
            compiler_params=pltpu.CompilerParams(
                dimension_semantics=("parallel", "arbitrary", "arbitrary"),
                vmem_limit_bytes=int(vmem_limit)),
            cost_estimate=pl.CostEstimate(
                flops=5 * B * padded, transcendentals=0,
                bytes_accessed=2 * B * padded * itemsize),
        )(x3)
    else:
        # Two-pass fallback (~3N traffic).
        vmem_limit = min(
            vmem_cap,
            max(32 << 20, 4 * tile_in_bytes + 4 * tile_f32_bytes + (4 << 20)))

        mn, inv = pl.pallas_call(
            functools.partial(_stats_kernel, **common),
            out_shape=(jax.ShapeDtypeStruct((B, L), fp32),
                       jax.ShapeDtypeStruct((B, L), fp32)),
            grid_spec=pltpu.PrefetchScalarGridSpec(
                num_scalar_prefetch=0,
                grid=(B, grid_t),
                in_specs=[pl.BlockSpec((1, R, L), lambda b, t: (b, t, 0))],
                out_specs=(pl.BlockSpec((1, L), lambda b, t: (b, 0)),
                           pl.BlockSpec((1, L), lambda b, t: (b, 0))),
                scratch_shapes=[pltpu.VMEM((acc_rows, L), fp32),
                                pltpu.VMEM((acc_rows, L), fp32)]),
            compiler_params=pltpu.CompilerParams(
                dimension_semantics=("parallel", "arbitrary"),
                vmem_limit_bytes=int(vmem_limit)),
            cost_estimate=pl.CostEstimate(
                flops=2 * B * padded, transcendentals=0,
                bytes_accessed=B * padded * itemsize + 2 * B * L * 4),
        )(x3)

        out3 = pl.pallas_call(
            _norm_kernel,
            out_shape=jax.ShapeDtypeStruct((B, n_rows, L), x.dtype),
            grid_spec=pltpu.PrefetchScalarGridSpec(
                num_scalar_prefetch=0,
                grid=(B, grid_t),
                in_specs=[pl.BlockSpec((1, R, L), lambda b, t: (b, t, 0)),
                          pl.BlockSpec((1, L), lambda b, t: (b, 0)),
                          pl.BlockSpec((1, L), lambda b, t: (b, 0))],
                out_specs=pl.BlockSpec((1, R, L), lambda b, t: (b, t, 0))),
            compiler_params=pltpu.CompilerParams(
                dimension_semantics=("parallel", "parallel"),
                vmem_limit_bytes=int(vmem_limit)),
            cost_estimate=pl.CostEstimate(
                flops=2 * B * padded, transcendentals=0,
                bytes_accessed=2 * B * padded * itemsize + 2 * B * L * 4),
        )(x3, mn, inv)

    out_flat = out3.reshape(B, padded)
    if padded != N:
        out_flat = out_flat[:, :N]
    return out_flat.reshape(orig_shape)


# ----------------------------------------------------------------------------
# Reference + tests.
# ----------------------------------------------------------------------------
def _reference(x):
    B = x.shape[0]
    C = x.shape[-1]
    flat = x.reshape(B, -1, C)
    mn = flat.min(axis=1)
    mx = flat.max(axis=1)
    shape = (B,) + (1,) * (x.ndim - 2) + (C,)
    return (x - mn.reshape(shape)) / (mx - mn).reshape(shape)


if __name__ == "__main__":
    key = jax.random.PRNGKey(0)
    k1, k2 = jax.random.split(key)

    # [batch, D, H, W, channels] — channels-last, as the PyTorch module expects.
    x1 = jax.random.uniform(k1, (2, 8, 8, 8, 4), dtype=jnp.float32) * 100.0
    # Unaligned spatial size: exercises pad + in-kernel tail masking.
    x2 = jax.random.normal(k2, (2, 5, 5, 5, 4), dtype=jnp.float32)

    cases = [
        (x1, dict(tile_rows=8)),                       # fused path, multi-tile
        (x1, dict(tile_rows=8, force_two_pass=True)),  # two-pass fallback
        (x2, dict()),                                  # fused + tail masking
        (x2, dict(force_two_pass=True)),               # two-pass + tail masking
    ]
    for xc, kw in cases:
        out = jax.block_until_ready(intensity_normalisation(xc, **kw))
        np.testing.assert_allclose(np.asarray(out), _reference(np.asarray(xc)),
                                   rtol=1e-5, atol=1e-5)

    print("KERNEL_OK")
</pallas_src>

<mosaic_0001>
module attributes {stable_mosaic.version = 11 : i64} {
  func.func @_fused_kernel(%arg0: i32, %arg1: i32, %arg2: i32, %arg3: memref<1x8x128xf32, #tpu.memory_space<vmem>>, %arg4: memref<1x8x128xf32, #tpu.memory_space<vmem>>, %arg5: memref<16x128xf32, #tpu.memory_space<vmem>>, %arg6: memref<8x128xf32, #tpu.memory_space<vmem>>, %arg7: memref<8x128xf32, #tpu.memory_space<vmem>>, %arg8: memref<1x128xf32, #tpu.memory_space<vmem>>, %arg9: memref<1x128xf32, #tpu.memory_space<vmem>>) attributes {dimension_semantics = [#tpu.dimension_semantics<parallel>, #tpu.dimension_semantics<arbitrary>, #tpu.dimension_semantics<arbitrary>], iteration_bounds = array<i64: 2, 2, 2>, scalar_prefetch = 0 : i64, scratch_operands = 5 : i64, tpu.core_type = #tpu.core_type<tc>, window_params = [{transform_indices = @transform_0, window_bounds = array<i64: 1, 8, 128>}, {transform_indices = @transform_1, window_bounds = array<i64: 1, 8, 128>}]} {
    %c8_i32 = arith.constant 8 : i32
    %0 = arith.muli %arg2, %c8_i32 : i32
    %1 = tpu.assume_multiple %0, 8 : i32
    %c0_i32 = arith.constant 0 : i32
    %2 = arith.cmpi eq, %arg1, %c0_i32 : i32
    %c0_i32_0 = arith.constant 0 : i32
    %3 = arith.cmpi eq, %arg2, %c0_i32_0 : i32
    %4 = arith.andi %2, %3 : i1
    %5 = arith.extui %4 : i1 to i32
    %c0_i32_1 = arith.constant 0 : i32
    %6 = arith.cmpi ne, %5, %c0_i32_1 : i32
    scf.if %6 {
      %cst = arith.constant 0x7F800000 : f32
      %18 = vector.broadcast %cst : f32 to vector<8x128xf32>
      %c0 = arith.constant 0 : index
      %c0_8 = arith.constant 0 : index
      %19 = vector.load %arg6[%c0, %c0_8] : memref<8x128xf32, #tpu.memory_space<vmem>>, vector<8x128xf32>
      tpu.vector_store %arg6[%c0, %c0_8], %18 {strides = array<i32>} : memref<8x128xf32, #tpu.memory_space<vmem>>, vector<8x128xf32>,
      %cst_9 = arith.constant 0xFF800000 : f32
      %20 = vector.broadcast %cst_9 : f32 to vector<8x128xf32>
      %c0_10 = arith.constant 0 : index
      %c0_11 = arith.constant 0 : index
      %21 = vector.load %arg7[%c0_10, %c0_11] : memref<8x128xf32, #tpu.memory_space<vmem>>, vector<8x128xf32>
      tpu.vector_store %arg7[%c0_10, %c0_11], %20 {strides = array<i32>} : memref<8x128xf32, #tpu.memory_space<vmem>>, vector<8x128xf32>,
    } else {
    }
    %c0_i32_2 = arith.constant 0 : i32
    %7 = arith.cmpi eq, %arg1, %c0_i32_2 : i32
    %8 = arith.extui %7 : i1 to i32
    %c0_i32_3 = arith.constant 0 : i32
    %9 = arith.cmpi ne, %8, %c0_i32_3 : i32
    scf.if %9 {
      %c0 = arith.constant 0 : index
      %c0_8 = arith.constant 0 : index
      %c0_9 = arith.constant 0 : index
      %18 = vector.load %arg3[%c0, %c0_8, %c0_9] : memref<1x8x128xf32, #tpu.memory_space<vmem>>, vector<1x8x128xf32>
      %19 = vector.shape_cast %18 : vector<1x8x128xf32> to vector<8x128xf32>
      %20 = arith.index_cast %1 : i32 to index
      %c0_10 = arith.constant 0 : index
      %21 = vector.load %arg5[%20, %c0_10] : memref<16x128xf32, #tpu.memory_space<vmem>>, vector<8x128xf32>
      tpu.vector_store %arg5[%20, %c0_10], %19 {strides = array<i32>} : memref<16x128xf32, #tpu.memory_space<vmem>>, vector<8x128xf32>,
      %c0_11 = arith.constant 0 : index
      %c0_12 = arith.constant 0 : index
      %22 = vector.load %arg6[%c0_11, %c0_12] : memref<8x128xf32, #tpu.memory_space<vmem>>, vector<8x128xf32>
      %23 = arith.minimumf %22, %19 : vector<8x128xf32>
      %c0_13 = arith.constant 0 : index
      %c0_14 = arith.constant 0 : index
      %24 = vector.load %arg6[%c0_13, %c0_14] : memref<8x128xf32, #tpu.memory_space<vmem>>, vector<8x128xf32>
      tpu.vector_store %arg6[%c0_13, %c0_14], %23 {strides = array<i32>} : memref<8x128xf32, #tpu.memory_space<vmem>>, vector<8x128xf32>,
      %c0_15 = arith.constant 0 : index
      %c0_16 = arith.constant 0 : index
      %25 = vector.load %arg7[%c0_15, %c0_16] : memref<8x128xf32, #tpu.memory_space<vmem>>, vector<8x128xf32>
      %26 = arith.maximumf %25, %19 : vector<8x128xf32>
      %c0_17 = arith.constant 0 : index
      %c0_18 = arith.constant 0 : index
      %27 = vector.load %arg7[%c0_17, %c0_18] : memref<8x128xf32, #tpu.memory_space<vmem>>, vector<8x128xf32>
      tpu.vector_store %arg7[%c0_17, %c0_18], %26 {strides = array<i32>} : memref<8x128xf32, #tpu.memory_space<vmem>>, vector<8x128xf32>,
    } else {
    }
    %c1_i32 = arith.constant 1 : i32
    %10 = arith.cmpi eq, %arg1, %c1_i32 : i32
    %c0_i32_4 = arith.constant 0 : i32
    %11 = arith.cmpi eq, %arg2, %c0_i32_4 : i32
    %12 = arith.andi %10, %11 : i1
    %13 = arith.extui %12 : i1 to i32
    %c0_i32_5 = arith.constant 0 : i32
    %14 = arith.cmpi ne, %13, %c0_i32_5 : i32
    scf.if %14 {
      %c0 = arith.constant 0 : index
      %c0_8 = arith.constant 0 : index
      %18 = vector.load %arg6[%c0, %c0_8] : memref<8x128xf32, #tpu.memory_space<vmem>>, vector<8x128xf32>
      %cst = arith.constant dense<0x7F800000> : vector<128xf32>
      %19 = vector.multi_reduction <minimumf>, %18, %cst [0] : vector<8x128xf32> to vector<128xf32>
      %20 = vector.shape_cast %19 : vector<128xf32> to vector<1x128xf32>
      %c0_9 = arith.constant 0 : index
      %c0_10 = arith.constant 0 : index
      %21 = vector.load %arg7[%c0_9, %c0_10] : memref<8x128xf32, #tpu.memory_space<vmem>>, vector<8x128xf32>
      %cst_11 = arith.constant dense<0xFF800000> : vector<128xf32>
      %22 = vector.multi_reduction <maximumf>, %21, %cst_11 [0] : vector<8x128xf32> to vector<128xf32>
      %23 = vector.shape_cast %22 : vector<128xf32> to vector<1x128xf32>
      %c4_i32 = arith.constant 4 : i32
      %24 = tpu.dynamic_rotate %20 by %c4_i32 dim 1 : vector<1x128xf32>, i32 -> vector<1x128xf32>
      %25 = arith.minimumf %20, %24 : vector<1x128xf32>
      %c4_i32_12 = arith.constant 4 : i32
      %26 = tpu.dynamic_rotate %23 by %c4_i32_12 dim 1 : vector<1x128xf32>, i32 -> vector<1x128xf32>
      %27 = arith.maximumf %23, %26 : vector<1x128xf32>
      %c8_i32_13 = arith.constant 8 : i32
      %28 = tpu.dynamic_rotate %25 by %c8_i32_13 dim 1 : vector<1x128xf32>, i32 -> vector<1x128xf32>
      %29 = arith.minimumf %25, %28 : vector<1x128xf32>
      %c8_i32_14 = arith.constant 8 : i32
      %30 = tpu.dynamic_rotate %27 by %c8_i32_14 dim 1 : vector<1x128xf32>, i32 -> vector<1x128xf32>
      %31 = arith.maximumf %27, %30 : vector<1x128xf32>
      %c16_i32 = arith.constant 16 : i32
      %32 = tpu.dynamic_rotate %29 by %c16_i32 dim 1 : vector<1x128xf32>, i32 -> vector<1x128xf32>
      %33 = arith.minimumf %29, %32 : vector<1x128xf32>
      %c16_i32_15 = arith.constant 16 : i32
      %34 = tpu.dynamic_rotate %31 by %c16_i32_15 dim 1 : vector<1x128xf32>, i32 -> vector<1x128xf32>
      %35 = arith.maximumf %31, %34 : vector<1x128xf32>
      %c32_i32 = arith.constant 32 : i32
      %36 = tpu.dynamic_rotate %33 by %c32_i32 dim 1 : vector<1x128xf32>, i32 -> vector<1x128xf32>
      %37 = arith.minimumf %33, %36 : vector<1x128xf32>
      %c32_i32_16 = arith.constant 32 : i32
      %38 = tpu.dynamic_rotate %35 by %c32_i32_16 dim 1 : vector<1x128xf32>, i32 -> vector<1x128xf32>
      %39 = arith.maximumf %35, %38 : vector<1x128xf32>
      %c64_i32 = arith.constant 64 : i32
      %40 = tpu.dynamic_rotate %37 by %c64_i32 dim 1 : vector<1x128xf32>, i32 -> vector<1x128xf32>
      %41 = arith.minimumf %37, %40 : vector<1x128xf32>
      %c64_i32_17 = arith.constant 64 : i32
      %42 = tpu.dynamic_rotate %39 by %c64_i32_17 dim 1 : vector<1x128xf32>, i32 -> vector<1x128xf32>
      %43 = arith.maximumf %39, %42 : vector<1x128xf32>
      %c0_18 = arith.constant 0 : index
      %c0_19 = arith.constant 0 : index
      %44 = vector.load %arg8[%c0_18, %c0_19] : memref<1x128xf32, #tpu.memory_space<vmem>>, vector<1x128xf32>
      tpu.vector_store %arg8[%c0_18, %c0_19], %41 {strides = array<i32>} : memref<1x128xf32, #tpu.memory_space<vmem>>, vector<1x128xf32>,
      %45 = arith.subf %43, %41 : vector<1x128xf32>
      %46 = tpu.reciprocal %45 : vector<1x128xf32> -> vector<1x128xf32>
      %c0_20 = arith.constant 0 : index
      %c0_21 = arith.constant 0 : index
      %47 = vector.load %arg9[%c0_20, %c0_21] : memref<1x128xf32, #tpu.memory_space<vmem>>, vector<1x128xf32>
      tpu.vector_store %arg9[%c0_20, %c0_21], %46 {strides = array<i32>} : memref<1x128xf32, #tpu.memory_space<vmem>>, vector<1x128xf32>,
    } else {
    }
    %c1_i32_6 = arith.constant 1 : i32
    %15 = arith.cmpi eq, %arg1, %c1_i32_6 : i32
    %16 = arith.extui %15 : i1 to i32
    %c0_i32_7 = arith.constant 0 : i32
    %17 = arith.cmpi ne, %16, %c0_i32_7 : i32
    scf.if %17 {
      %18 = arith.index_cast %1 : i32 to index
      %c0 = arith.constant 0 : index
      %19 = vector.load %arg5[%18, %c0] : memref<16x128xf32, #tpu.memory_space<vmem>>, vector<8x128xf32>
      %c0_8 = arith.constant 0 : index
      %c0_9 = arith.constant 0 : index
      %20 = vector.load %arg8[%c0_8, %c0_9] : memref<1x128xf32, #tpu.memory_space<vmem>>, vector<1x128xf32>
      %21 = vector.broadcast %20 : vector<1x128xf32> to vector<8x128xf32>
      %22 = arith.subf %19, %21 : vector<8x128xf32>
      %c0_10 = arith.constant 0 : index
      %c0_11 = arith.constant 0 : index
      %23 = vector.load %arg9[%c0_10, %c0_11] : memref<1x128xf32, #tpu.memory_space<vmem>>, vector<1x128xf32>
      %24 = vector.broadcast %23 : vector<1x128xf32> to vector<8x128xf32>
      %25 = arith.mulf %22, %24 : vector<8x128xf32>
      %c0_12 = arith.constant 0 : index
      %c0_13 = arith.constant 0 : index
      %c0_14 = arith.constant 0 : index
      %26 = vector.load %arg4[%c0_12, %c0_13, %c0_14] : memref<1x8x128xf32, #tpu.memory_space<vmem>>, vector<1x8x128xf32>
      %27 = vector.shape_cast %26 : vector<1x8x128xf32> to vector<8x128xf32>
      %28 = vector.shape_cast %25 : vector<8x128xf32> to vector<1x8x128xf32>
      tpu.vector_store %arg4[%c0_12, %c0_13, %c0_14], %28 {strides = array<i32>} : memref<1x8x128xf32, #tpu.memory_space<vmem>>, vector<1x8x128xf32>,
    } else {
    }
    return
  }
  func.func @transform_0(%arg0: i32, %arg1: i32, %arg2: i32) -> (i32, i32, i32) {
    %c1_i32 = arith.constant 1 : i32
    %0 = arith.subi %c1_i32, %arg1 : i32
    %1 = arith.muli %0, %arg2 : i32
    %c1_i32_0 = arith.constant 1 : i32
    %2 = arith.muli %arg1, %c1_i32_0 : i32
    %3 = arith.addi %1, %2 : i32
    %c0_i32 = arith.constant 0 : i32
    %c0_i32_1 = arith.constant 0 : i32
    return %arg0, %3, %c0_i32 : i32, i32, i32
  }
  func.func @transform_1(%arg0: i32, %arg1: i32, %arg2: i32) -> (i32, i32, i32) {
    %0 = arith.muli %arg1, %arg2 : i32
    %c0_i32 = arith.constant 0 : i32
    %c0_i32_0 = arith.constant 0 : i32
    return %arg0, %0, %c0_i32 : i32, i32, i32
  }
}

</mosaic_0001>

<llo_original>
// kernel: intensity_normalisation.1
$region0: #{intensity_normalisation.1}
  #allocation0 [shape = 'u32[]', space=smem, size = 0x4, offset = 0x4, fixed_abs, tag = 'smem constant byte address 0x4 - core index']
  #allocation1 [shape = 'u32[144,128]{1,0:T(1,128)}', space=vmem, size = 0x12000, scoped, tag = 'internal scratch']
  #allocation2 [shape = 'f32[16,128]{1,0:T(8,128)}', space=vmem, size = 0x2000, scoped, tag = 'scratch operand']
  #allocation3 [shape = 'f32[8,128]{1,0:T(8,128)}', space=vmem, size = 0x1000, scoped, tag = 'scratch operand']
  #allocation4 [shape = 'f32[8,128]{1,0:T(8,128)}', space=vmem, size = 0x1000, scoped, tag = 'scratch operand']
  #allocation5 [shape = 'f32[1,128]{1,0:T(1,128)}', space=vmem, size = 0x200, scoped, tag = 'scratch operand']
  #allocation6 [shape = 'f32[1,128]{1,0:T(1,128)}', space=vmem, size = 0x200, scoped, tag = 'scratch operand']
  %s0 = inlined_call_operand.vmem [shape: f32[2,16,128], index: 0, kind: input, shape index: {}]
  %s1 = inlined_call_operand.vmem [shape: f32[2,16,128], index: 1, kind: output, shape index: {}]
  %s2 = sld [smem:[#allocation0]]
  $region53: #{intensity_normalisation.1} parent=0
    _
  %s4 = ssub.s32 1, %s2
  %s5 = scalar_select 0, %s4, %s2
  loop: start=0, step=1, limit=10
  $region2: #{intensity_normalisation.1} parent=0 // loop_pre_header
    _
  $region3: #{intensity_normalisation.1} parent=0 // loop_header
    %s7 = sphi 0, %s11
    %p8 = scmp.ge.s32.totalorder %s7, 10
    %s14 = sphi 0, %s33
    %s15 = sphi 0, %s29
    %s16 = sphi 0, %s25
    %s17 = sphi 0, %s14
    %s18 = sphi 0, %s15
    %s19 = sphi 0, %s16
    %s20 = sphi 0, %s17
    %s21 = sphi 0, %s18
    %s22 = sphi 0, %s19
    %s44 = sphi 0, %s46
    %s47 = sphi 0, %s44
    %s48 = sphi 0, %s47
    %s64 = sphi 0, %s48
    %s74 = sphi 0, %s76
    %s77 = sphi 0, %s74
    %s78 = sphi 0, %s77
    %s94 = sphi 0, %s78
  $region4: #{intensity_normalisation.1} parent=0 // loop_header_branch
    %10 = sbr.rel (%p8) target = $region8
  $region5: #{intensity_normalisation.1} parent=0 // loop_body
    %s12 = ssub.s32 %s7, 1
    %s13 = ssub.s32 %s7, 2
    %s23 = sadd.s32 1, %s16
    %p24 = scmp.ge.s32.totalorder %s23, 2
    %s25 = scalar_select %p24, 0, %s23
    %s26 = sadd.s32 1, %s15
    %s27 = scalar_select %p24, %s26, %s15
    %p28 = scmp.ge.s32.totalorder %s27, 2
    %s29 = scalar_select %p28, 0, %s27
    %s30 = sadd.s32 1, %s14
    %s31 = scalar_select %p28, %s30, %s14
    %p32 = scmp.ge.s32.totalorder %s31, 2
    %s33 = scalar_select %p32, 0, %s31
    %s34 = ssub.s32 1, %s15
    %s35 = smul.u32 %s34, %s16
    %s36 = sadd.s32 %s35, %s15
    %s37 = ssub.s32 1, %s29
    %s38 = smul.u32 %s37, %s25
    %s39 = sadd.s32 %s38, %s29
    %s40 = ssub.s32 %s14, %s33
    %s41 = ssub.s32 %s36, %s39
    %s42 = sor.u32 %s40, %s41
    %p43 = scmp.eq.s32.totalorder %s42, 0
    %s45 = sadd.s32 %s44, 1
    %s46 = scalar_select %p43, %s44, %s45
    %p49 = pneg %p43
    %p50 = scmp.eq.s32.totalorder %s7, 7
    %p51 = por %p49, %p50
    %p52 = scmp.ne.s32.totalorder %s44, %s47
    %p53 = scmp.eq.s32.totalorder %s7, 0
    %p54 = por %p52, %p53
    %p55 = scmp.ne.s32.totalorder %s44, %s47
    %p56 = scmp.eq.s32.totalorder %s12, 7
    %p57 = por %p55, %p56
    %p58 = scmp.ne.s32.totalorder %s47, %s48
    %p59 = scmp.eq.s32.totalorder %s12, 0
    %p60 = por %p58, %p59
    %p61 = scmp.ne.s32.totalorder %s47, %s48
    %p62 = scmp.eq.s32.totalorder %s13, 7
    %p63 = por %p61, %p62
    %p65 = scmp.ne.s32.totalorder %s48, %s64
    %p66 = scmp.eq.s32.totalorder %s13, 0
    %p67 = por %p65, %p66
    %s68 = smul.u32 %s15, %s16
    %s69 = smul.u32 %s29, %s25
    %s70 = ssub.s32 %s14, %s33
    %s71 = ssub.s32 %s68, %s69
    %s72 = sor.u32 %s70, %s71
    %p73 = scmp.eq.s32.totalorder %s72, 0
    %s75 = sadd.s32 %s74, 1
    %s76 = scalar_select %p73, %s74, %s75
    %p79 = pneg %p73
    %p80 = scmp.eq.s32.totalorder %s7, 7
    %p81 = por %p79, %p80
    %p82 = scmp.ne.s32.totalorder %s74, %s77
    %p83 = scmp.eq.s32.totalorder %s7, 0
    %p84 = por %p82, %p83
    %p85 = scmp.ne.s32.totalorder %s74, %s77
    %p86 = scmp.eq.s32.totalorder %s12, 7
    %p87 = por %p85, %p86
    %p88 = scmp.ne.s32.totalorder %s77, %s78
    %p89 = scmp.eq.s32.totalorder %s12, 0
    %p90 = por %p88, %p89
    %p91 = scmp.ne.s32.totalorder %s77, %s78
    %p92 = scmp.eq.s32.totalorder %s13, 7
    %p93 = por %p91, %p92
    %p95 = scmp.ne.s32.totalorder %s78, %s94
    %p96 = scmp.eq.s32.totalorder %s13, 0
    %p97 = por %p95, %p96
    %p98 = scmp.le.s32.totalorder 1, %s7
    %p99 = scmp.lt.s32.totalorder %s7, 9
    %p100 = pnand %p98, %p99
    %p101 = pneg %p100
    // Predicated region
    $region9: #{intensity_normalisation.1} parent=5 // pred_check
      _
    $region10: #{intensity_normalisation.1} parent=5 // pred_check_branch
      %103 = sbr.rel (%p100) target = $region12
    $region11: #{intensity_normalisation.1} parent=5 // pred_region
      %s104 = ssub.s32 %s7, 1
    $region12: #{intensity_normalisation.1} parent=5 // pred_fallthru
      _
    %p105 = scmp.lt.s32.totalorder %s7, 8
    // Predicated region
    $region13: #{intensity_normalisation.1} parent=5 // pred_check
      %p106 = pneg %p105
    $region14: #{intensity_normalisation.1} parent=5 // pred_check_branch
      %108 = sbr.rel (%p106) target = $region16
    $region15: #{intensity_normalisation.1} parent=5 // pred_region
      // Predicated region
      $region17: #{intensity_normalisation.1} parent=15 // pred_check
        %p109 = pneg %p54
      $region18: #{intensity_normalisation.1} parent=15 // pred_check_branch
        %111 = sbr.rel (%p109) target = $region20
      $region19: #{intensity_normalisation.1} parent=15 // pred_region
        %s112 = ssub.s32 1, %s15
        %s113 = smul.u32 %s112, %s16
        %s114 = sadd.s32 %s113, %s15
        %p115 = scmp.lt.s32.totalorder %s14, 1
        %s116 = scalar_select %p115, %s14, 1
        %p117 = scmp.lt.s32.totalorder %s114, 1
        %s118 = scalar_select %p117, %s114, 1
        %s119 = smul.addr %s116, 2
        %s120 = sadd.s32 %s118, %s119
        %s121 = smul.addr %s120, 8
        %s122 = scalar_lea.vmem %s0, %s121
        %s123 = ssub.s32 1, %s15
        %s124 = smul.u32 %s123, %s16
        %s125 = sadd.s32 %s124, %s15
      $region20: #{intensity_normalisation.1} parent=15 // pred_fallthru
        _
    $region16: #{intensity_normalisation.1} parent=5 // pred_fallthru
      _
    %p126 = scmp.le.s32.totalorder 1, %s7
    %p127 = scmp.lt.s32.totalorder %s7, 9
    %p128 = pnand %p126, %p127
    %p129 = pneg %p128
    // Predicated region
    $region21: #{intensity_normalisation.1} parent=5 // pred_check
      _
    $region22: #{intensity_normalisation.1} parent=5 // pred_check_branch
      %131 = sbr.rel (%p128) target = $region24
    $region23: #{intensity_normalisation.1} parent=5 // pred_region
      %s132 = ssub.s32 %s7, 1
      %s133 = ssub.s32 1, %s18
      %s134 = smul.u32 %s133, %s19
      %s135 = sadd.s32 %s134, %s18
      %p136 = scmp.lt.s32.totalorder %s17, 1
      %s137 = scalar_select %p136, %s17, 1
      %p138 = scmp.lt.s32.totalorder %s135, 1
      %s139 = scalar_select %p138, %s135, 1
      %s140 = smul.addr %s137, 2
      %s141 = sadd.s32 %s139, %s140
      %s142 = smul.addr %s141, 8
      %s143 = scalar_lea.vmem %s0, %s142
      %p144 = pneg %p60
      %p145 = pneg %p57
      %p146 = pneg %p90
      %p147 = pneg %p87
      %s148 = smul.u32 %s18, %s19
      %p149 = scmp.lt.s32.totalorder %s17, 1
      %s150 = scalar_select %p149, %s17, 1
      %p151 = scmp.lt.s32.totalorder %s148, 1
      %s152 = scalar_select %p151, %s148, 1
      %s153 = smul.addr %s150, 2
      %s154 = sadd.s32 %s152, %s153
      %s155 = smul.addr %s154, 8
      %s156 = scalar_lea.vmem %s1, %s155
      %s157 = ssub.s32 1, %s18
      %s158 = smul.u32 %s157, %s19
      %s159 = sadd.s32 %s158, %s18
      %p160 = scmp.lt.s32.totalorder %s17, 1
      %s161 = scalar_select %p160, %s17, 1
      %p162 = scmp.lt.s32.totalorder %s159, 1
      %s163 = scalar_select %p162, %s159, 1
      %s164 = smul.addr %s161, 2
      %s165 = sadd.s32 %s163, %s164
      %s166 = smul.addr %s165, 8
      %s167 = scalar_lea.vmem %s0, %s166
      %s168 = ssub.s32 1, %s18
      %s169 = smul.u32 %s168, %s19
      %s170 = sadd.s32 %s169, %s18
      %s171 = smul.u32 %s18, %s19
      %p172 = scmp.lt.s32.totalorder %s17, 1
      %s173 = scalar_select %p172, %s17, 1
      %p174 = scmp.lt.s32.totalorder %s171, 1
      %s175 = scalar_select %p174, %s171, 1
      %s176 = smul.addr %s173, 2
      %s177 = sadd.s32 %s175, %s176
      %s178 = smul.addr %s177, 8
      %s179 = scalar_lea.vmem %s1, %s178
      %s180 = smul.u32 %s18, %s19
      %s181 = smul.u32 %s19, 8
      %p182 = scmp.eq.s32.totalorder %s18, 0
      %p183 = scmp.eq.s32.totalorder %s19, 0
      %p184 = pnand %p182, %p183
      %p185 = pneg %p184
      // Predicated region
      $region25: #{intensity_normalisation.1} parent=23 // pred_check
        _
      $region26: #{intensity_normalisation.1} parent=23 // pred_check_branch
        %187 = sbr.rel (%p184) target = $region28
      $region27: #{intensity_normalisation.1} parent=23 // pred_region
        %188 = vst [vmem:[#allocation3] sm:$0xff] inf
        %189 = vst [vmem:[#allocation4] sm:$0xff] -inf
      $region28: #{intensity_normalisation.1} parent=23 // pred_fallthru
        _
      // Predicated region
      $region29: #{intensity_normalisation.1} parent=23 // pred_check
        %p190 = pneg %p182
      $region30: #{intensity_normalisation.1} parent=23 // pred_check_branch
        %192 = sbr.rel (%p190) target = $region32
      $region31: #{intensity_normalisation.1} parent=23 // pred_region
        %v193 = vld [vmem:[%s167] sm:$0xff]
        %s194 = scalar_lea.vmem [#allocation2], %s181
        %195 = vst [vmem:[%s194] sm:$0xff] %v193
        %v196 = vld [vmem:[#allocation3] sm:$0xff]
        %v197 = vmin.f32 %v196, %v193
        %198 = vst [vmem:[#allocation3] sm:$0xff] %v197
        %v199 = vld [vmem:[#allocation4] sm:$0xff]
        %v200 = vmax.f32 %v199, %v193
        %201 = vst [vmem:[#allocation4] sm:$0xff] %v200
      $region32: #{intensity_normalisation.1} parent=23 // pred_fallthru
        _
      %p202 = scmp.eq.s32.totalorder %s18, 1
      %p203 = pnand %p202, %p183
      %p204 = pneg %p203
      // Predicated region
      $region33: #{intensity_normalisation.1} parent=23 // pred_check
        _
      $region34: #{intensity_normalisation.1} parent=23 // pred_check_branch
        %206 = sbr.rel (%p203) target = $region36
      $region35: #{intensity_normalisation.1} parent=23 // pred_region
        %v207 = vld [vmem:[#allocation3] sm:$0xff]
        %v208 = vrot.slane %v207, 4
        %v209 = vmin.f32 %v207, %v208
        %v210 = vrot.slane %v209, 2
        %v211 = vmin.f32 %v209, %v210
        %v212 = vrot.slane %v211, 1
        %v213 = vmin.f32 %v211, %v212
        %v214 = vld [vmem:[#allocation4] sm:$0xff]
        %v215 = vrot.slane %v214, 4
        %v216 = vmax.f32 %v214, %v215
        %v217 = vrot.slane %v216, 2
        %v218 = vmax.f32 %v216, %v217
        %v219 = vrot.slane %v218, 1
        %v220 = vmax.f32 %v218, %v219
        %221 = vrot.lane.b32.xlu0 %v213, 4
        %v222 = vpop.permute.xlu0 %221
        %v223 = vmin.f32 %v213, %v222
        %224 = vrot.lane.b32.xlu0 %v220, 4
        %v225 = vpop.permute.xlu0 %224
        %v226 = vmax.f32 %v220, %v225
        %227 = vrot.lane.b32.xlu0 %v223, 8
        %v228 = vpop.permute.xlu0 %227
        %v229 = vmin.f32 %v223, %v228
        %230 = vrot.lane.b32.xlu0 %v226, 8
        %v231 = vpop.permute.xlu0 %230
        %v232 = vmax.f32 %v226, %v231
        %233 = vrot.lane.b32.xlu0 %v229, 16
        %v234 = vpop.permute.xlu0 %233
        %v235 = vmin.f32 %v229, %v234
        %236 = vrot.lane.b32.xlu0 %v232, 16
        %v237 = vpop.permute.xlu0 %236
        %v238 = vmax.f32 %v232, %v237
        %239 = vrot.lane.b32.xlu0 %v235, 32
        %v240 = vpop.permute.xlu0 %239
        %v241 = vmin.f32 %v235, %v240
        %242 = vrot.lane.b32.xlu0 %v238, 32
        %v243 = vpop.permute.xlu0 %242
        %v244 = vmax.f32 %v238, %v243
        %245 = vrot.lane.b32.xlu0 %v241, 64
        %v246 = vpop.permute.xlu0 %245
        %v247 = vmin.f32 %v241, %v246
        %248 = vrot.lane.b32.xlu0 %v244, 64
        %v249 = vpop.permute.xlu0 %248
        %v250 = vmax.f32 %v244, %v249
        %251 = vst [vmem:[#allocation5] sm:$0x1] %v247
        %v252 = vsub.f32 %v250, %v247
        %v253 = vrcp.pop %v252
        %254 = vst [vmem:[#allocation6] sm:$0x1] %v253
      $region36: #{intensity_normalisation.1} parent=23 // pred_fallthru
        _
      // Predicated region
      $region37: #{intensity_normalisation.1} parent=23 // pred_check
        %p255 = pneg %p202
      $region38: #{intensity_normalisation.1} parent=23 // pred_check_branch
        %257 = sbr.rel (%p255) target = $region40
      $region39: #{intensity_normalisation.1} parent=23 // pred_region
        %s258 = scalar_lea.vmem [#allocation2], %s181
        %v259 = vld [vmem:[%s258] sm:$0xff]
        %v260 = vld [vmem:[#allocation5] sm:$0x1]
        %v262 = vlaneseq
        %v263 = vshrl.u32 %v262, 7
        %v264 = vsub.s32 0, %v263
        %v265 = vrot.slane %v260, %v264
        %v267 = vsub.f32 %v259, %v265
        %v268 = vld [vmem:[#allocation6] sm:$0x1]
        %v270 = vlaneseq
        %v271 = vshrl.u32 %v270, 7
        %v272 = vsub.s32 0, %v271
        %v273 = vrot.slane %v268, %v272
        %v275 = vmul.f32 %v267, %v273
        %276 = vst [vmem:[%s179] sm:$0xff] %v275
      $region40: #{intensity_normalisation.1} parent=23 // pred_fallthru
        _
      %s277 = smul.u32 %s18, %s19
      %p278 = scmp.lt.s32.totalorder %s17, 1
      %s279 = scalar_select %p278, %s17, 1
      %p280 = scmp.lt.s32.totalorder %s277, 1
      %s281 = scalar_select %p280, %s277, 1
      %s282 = smul.addr %s279, 2
      %s283 = sadd.s32 %s281, %s282
      %s284 = smul.addr %s283, 8
      %s285 = scalar_lea.vmem %s1, %s284
      // Predicated region
      $region41: #{intensity_normalisation.1} parent=23 // pred_check
        %p286 = pneg %p87
      $region42: #{intensity_normalisation.1} parent=23 // pred_check_branch
        %288 = sbr.rel (%p286) target = $region44
      $region43: #{intensity_normalisation.1} parent=23 // pred_region
        %s289 = smul.u32 %s18, %s19
      $region44: #{intensity_normalisation.1} parent=23 // pred_fallthru
        _
    $region24: #{intensity_normalisation.1} parent=5 // pred_fallthru
      _
    %p290 = scmp.le.s32.totalorder 2, %s7
    // Predicated region
    $region45: #{intensity_normalisation.1} parent=5 // pred_check
      %p291 = pneg %p290
    $region46: #{intensity_normalisation.1} parent=5 // pred_check_branch
      %293 = sbr.rel (%p291) target = $region48
    $region47: #{intensity_normalisation.1} parent=5 // pred_region
      %s294 = ssub.s32 %s7, 2
      // Predicated region
      $region49: #{intensity_normalisation.1} parent=47 // pred_check
        %p295 = pneg %p93
      $region50: #{intensity_normalisation.1} parent=47 // pred_check_branch
        %297 = sbr.rel (%p295) target = $region52
      $region51: #{intensity_normalisation.1} parent=47 // pred_region
        %s298 = smul.u32 %s21, %s22
        %p299 = scmp.lt.s32.totalorder %s20, 1
        %s300 = scalar_select %p299, %s20, 1
        %p301 = scmp.lt.s32.totalorder %s298, 1
        %s302 = scalar_select %p301, %s298, 1
        %s303 = smul.addr %s300, 2
        %s304 = sadd.s32 %s302, %s303
        %s305 = smul.addr %s304, 8
        %s306 = scalar_lea.vmem %s1, %s305
      $region52: #{intensity_normalisation.1} parent=47 // pred_fallthru
        _
    $region48: #{intensity_normalisation.1} parent=5 // pred_fallthru
      _
  $region6: #{intensity_normalisation.1} parent=0 // loop_footer
    %s11 = sadd.s32 1, %s7
  $region7: #{intensity_normalisation.1} parent=0 // loop_footer_branch
    %6 = sbr.rel target = $region3
  $region8: #{intensity_normalisation.1} parent=0 // loop_exit
    _

</llo_original>
